<compile_context>
chip_gen: v7x
topology: tpu7x:2x2x1
jax: 0.10.0
libtpu: 0.0.40
codegen_flags: <defaults>
</compile_context>

<pallas_src>
import functools
import numpy as np
import jax
import jax.numpy as jnp
from jax import lax
from jax.experimental import pallas as pl
from jax.experimental.pallas import tpu as pltpu

EPS = 1e-5                      # torch BatchNorm default eps
LANE = 128                      # pad channel axes to multiples of the TPU lane width
VMEM_LIMIT = 32 * 1024 * 1024   # explicit scoped-VMEM limit (fits v5e/v6e/v7x)


def _round_up(x, m):
    return ((x + m - 1) // m) * m


def _choose_row_tile(hw, target=512):
    """Largest multiple-of-8 divisor of H*W that is <= target (tiles never cross images)."""
    best, t = None, 8
    while t <= min(hw, target):
        if hw % t == 0:
            best = t
        t += 8
    assert best is not None, "H*W must be divisible by 8"
    return best


# --------------------------------------------------------------------------------------
# Pass 1: grouped 3x3 conv (block-diagonal im2col matmul) + one-pass BN1 moments,
#         folded into final (scale, shift) on the last grid step.
# --------------------------------------------------------------------------------------
def _conv_stats_kernel(xcol_ref, wcol_ref, g1_ref, b1_ref,
                       y_ref, scale_ref, shift_ref, *, n_rows):
    y = jnp.dot(xcol_ref[...], wcol_ref[...], preferred_element_type=jnp.float32)
    y_ref[...] = y.astype(y_ref.dtype)               # bf16 writeback (halves HBM traffic)

    @pl.when(pl.program_id(0) == 0)
    def _():
        scale_ref[...] = jnp.zeros_like(scale_ref)
        shift_ref[...] = jnp.zeros_like(shift_ref)

    # running moments accumulated in the resident output blocks (f32, pre-cast y)
    scale_ref[...] += jnp.sum(y, axis=0, keepdims=True)        # sum(y)
    shift_ref[...] += jnp.sum(y * y, axis=0, keepdims=True)    # sum(y^2)

    @pl.when(pl.program_id(0) == pl.num_programs(0) - 1)
    def _():
        inv_n = 1.0 / n_rows
        mu = scale_ref[...] * inv_n
        var = shift_ref[...] * inv_n - mu * mu
        sc = g1_ref[...] * lax.rsqrt(var + EPS)                # EUP
        scale_ref[...] = sc
        shift_ref[...] = b1_ref[...] - mu * sc


# --------------------------------------------------------------------------------------
# Pass 2: BN+ReLU -> radix split-sum -> per-image GAP -> attention head + RadixSoftmax
# --------------------------------------------------------------------------------------
def _gap_attention_kernel(y_ref, scale_ref, shift_ref,
                          w1_ref, cb1_ref, g2_ref, b2_ref, w2_ref, cb2_ref,
                          atten_ref, gap_acc,
                          *, hw, tiles_per_image, radix, cp):
    i = pl.program_id(0)

    @pl.when(i == 0)
    def _():
        gap_acc[...] = jnp.zeros_like(gap_acc)

    # fused BN1 apply (scale/shift precomputed in pass 1) + ReLU
    yb = jnp.maximum(y_ref[...] * scale_ref[...] + shift_ref[...], 0.0)  # (TILE, radix*cp)

    # radix split-sum (lane-block-aligned slices) and per-image GAP accumulation
    concat = yb[:, 0:cp]
    for r in range(1, radix):
        concat = concat + yb[:, r * cp:(r + 1) * cp]
    tile_sum = jnp.sum(concat, axis=0, keepdims=True)          # (1, cp)

    b = i // tiles_per_image                                    # rows are batch-major
    row_ids = lax.broadcasted_iota(jnp.int32, gap_acc.shape, 0)
    gap_acc[...] += jnp.where(row_ids == b, tile_sum, 0.0)

    # tiny attention head on the last grid step (all operands resident in VMEM)
    @pl.when(i == pl.num_programs(0) - 1)
    def _():
        gap = gap_acc[...] * (1.0 / hw)                         # (B, cp)
        a1 = jnp.dot(gap, w1_ref[...], preferred_element_type=jnp.float32) + cb1_ref[...]
        m1 = jnp.mean(a1, axis=0, keepdims=True)
        v1 = jnp.mean(a1 * a1, axis=0, keepdims=True) - m1 * m1
        a1 = jnp.maximum((a1 - m1) * lax.rsqrt(v1 + EPS) * g2_ref[...] + b2_ref[...], 0.0)
        # w2 columns pre-permuted so logits are already in (radix, channel) order
        logits = jnp.dot(a1, w2_ref[...], preferred_element_type=jnp.float32) + cb2_ref[...]
        if radix > 1:
            chunks = [logits[:, r * cp:(r + 1) * cp] for r in range(radix)]
            m = chunks[0]
            for c in chunks[1:]:
                m = jnp.maximum(m, c)
            exps = [jnp.exp(c - m) for c in chunks]
            denom = exps[0]
            for e in exps[1:]:
                denom = denom + e
            inv = pl.reciprocal(denom, approx=True)             # EUP slot, ~free
            for r in range(radix):
                atten_ref[:, r * cp:(r + 1) * cp] = exps[r] * inv
        else:
            atten_ref[...] = 1.0 / (1.0 + jnp.exp(-logits))


# --------------------------------------------------------------------------------------
# Pass 3: BN+ReLU again + attention-weighted radix sum, lane-dense output
# --------------------------------------------------------------------------------------
def _apply_attention_kernel(y_ref, scale_ref, shift_ref, atten_ref, out_ref,
                            *, tiles_per_image, radix, cp):
    i = pl.program_id(0)
    yb = jnp.maximum(y_ref[...] * scale_ref[...] + shift_ref[...], 0.0)  # (TILE, radix*cp)

    # pick this image's attention row (tiles never cross image boundaries)
    b = i // tiles_per_image
    row_ids = lax.broadcasted_iota(jnp.int32, atten_ref.shape, 0)
    att = jnp.sum(jnp.where(row_ids == b, atten_ref[...], 0.0), axis=0, keepdims=True)

    res = att[:, 0:cp] * yb[:, 0:cp]
    for r in range(1, radix):
        res = res + att[:, r * cp:(r + 1) * cp] * yb[:, r * cp:(r + 1) * cp]
    out_ref[...] = res


# --------------------------------------------------------------------------------------
# Host-side (one-time) weight repacking into dense, lane-padded layouts
# --------------------------------------------------------------------------------------
def _prepare_weights(params, *, c_in, channels, radix, cardinality):
    crt = channels * radix
    inner = params['w1'].shape[0]
    groups1 = cardinality * radix
    CP = _round_up(channels, LANE)
    IP = _round_up(inner, LANE)
    crt_pad = radix * CP
    K = 9 * c_in

    # logical conv-output channel o -> lane-padded column (o // channels)*CP + (o % channels)
    o = np.arange(crt)
    pad_col = (o // channels) * CP + (o % channels)

    # dense block-diagonal 3x3 weights (rows tap-major, columns lane-padded)
    wc = np.asarray(params['w_conv'], np.float32)               # (crt, c_in/groups1, 3, 3)
    cin_g, cout_g = c_in // groups1, crt // groups1
    wcol = np.zeros((K, crt_pad), np.float32)
    for kh in range(3):
        for kw in range(3):
            base = (kh * 3 + kw) * c_in
            for g in range(groups1):
                rows = slice(base + g * cin_g, base + (g + 1) * cin_g)
                cols = pad_col[g * cout_g:(g + 1) * cout_g]
                wcol[rows, cols] = wc[g * cout_g:(g + 1) * cout_g, :, kh, kw].T

    g1 = np.zeros((1, crt_pad), np.float32); g1[0, pad_col] = np.asarray(params['g1'])
    b1 = np.zeros((1, crt_pad), np.float32); b1[0, pad_col] = np.asarray(params['b1'])

    # first 1x1 grouped conv (groups=cardinality), dense (CP, IP)
    w1 = np.asarray(params['w1'], np.float32)[:, :, 0, 0]       # (inner, channels/cardinality)
    cin_g, cout_g = channels // cardinality, inner // cardinality
    w1d = np.zeros((CP, IP), np.float32)
    for g in range(cardinality):
        w1d[g * cin_g:(g + 1) * cin_g, g * cout_g:(g + 1) * cout_g] = \
            w1[g * cout_g:(g + 1) * cout_g, :].T
    cb1 = np.zeros((1, IP), np.float32); cb1[0, :inner] = np.asarray(params['b1c'])
    g2 = np.zeros((1, IP), np.float32); g2[0, :inner] = np.asarray(params['g2'])
    b2 = np.zeros((1, IP), np.float32); b2[0, :inner] = np.asarray(params['b2bn'])

    # second 1x1 grouped conv (groups=cardinality); output columns permuted so the logits
    # come out in (radix, channel) order matching the radix splits (RadixSoftmax reshape).
    w2 = np.asarray(params['w2'], np.float32)[:, :, 0, 0]       # (crt, inner/cardinality)
    cin_g, cout_g = inner // cardinality, crt // cardinality
    w2d = np.zeros((inner, crt), np.float32)
    for g in range(cardinality):
        w2d[g * cin_g:(g + 1) * cin_g, g * cout_g:(g + 1) * cout_g] = \
            w2[g * cout_g:(g + 1) * cout_g, :].T
    cp_per = channels // cardinality
    rem = o % channels
    perm = (rem // cp_per) * (radix * cp_per) + (o // channels) * cp_per + (rem % cp_per)
    w2p = np.zeros((IP, crt_pad), np.float32)
    w2p[:inner, pad_col] = w2d[:, perm]
    cb2 = np.zeros((1, crt_pad), np.float32)
    cb2[0, pad_col] = np.asarray(params['b2c'])[perm]

    return dict(
        wcol=jnp.asarray(wcol, jnp.bfloat16),
        g1=jnp.asarray(g1), b1=jnp.asarray(b1),
        w1=jnp.asarray(w1d), cb1=jnp.asarray(cb1),
        g2=jnp.asarray(g2), b2=jnp.asarray(b2),
        w2=jnp.asarray(w2p), cb2=jnp.asarray(cb2),
        CP=CP, IP=IP, crt_pad=crt_pad, K=K)


def split_attention_conv(x_nchw, params, *, radix, cardinality, channels):
    B, c_in, H, W = x_nchw.shape
    HW = H * W
    N = B * HW
    dev = _prepare_weights(params, c_in=c_in, channels=channels,
                           radix=radix, cardinality=cardinality)
    CP, IP, crt_pad, K = dev['CP'], dev['IP'], dev['crt_pad'], dev['K']

    TILE = _choose_row_tile(HW)
    tiles_per_image = HW // TILE
    num_tiles = N // TILE

    # ---- glue: im2col ('same' padding, 3x3, stride 1), rows batch-major, bf16 ----
    xp = jnp.pad(x_nchw, ((0, 0), (0, 0), (1, 1), (1, 1)))
    cols = []
    for kh in range(3):
        for kw in range(3):
            patch = xp[:, :, kh:kh + H, kw:kw + W]
            cols.append(jnp.transpose(patch, (0, 2, 3, 1)).reshape(N, c_in))
    xcol = jnp.concatenate(cols, axis=1).astype(jnp.bfloat16)   # (N, 9*Cin)

    row_spec = lambda width: pl.BlockSpec((TILE, width), lambda i: (i, 0))
    const_spec = lambda shape: pl.BlockSpec(shape, lambda i: (0, 0))

    # ---- pass 1: conv + BN moments -> (y bf16, scale, shift) ----
    kern1 = functools.partial(_conv_stats_kernel, n_rows=N)
    y_full, scale, shift = pl.pallas_call(
        kern1,
        grid=(num_tiles,),
        in_specs=[row_spec(K), const_spec((K, crt_pad)),
                  const_spec((1, crt_pad)), const_spec((1, crt_pad))],
        out_specs=[pl.BlockSpec((TILE, crt_pad), lambda i: (i, 0)),
                   const_spec((1, crt_pad)), const_spec((1, crt_pad))],
        out_shape=[jax.ShapeDtypeStruct((N, crt_pad), jnp.bfloat16),
                   jax.ShapeDtypeStruct((1, crt_pad), jnp.float32),
                   jax.ShapeDtypeStruct((1, crt_pad), jnp.float32)],
        compiler_params=pltpu.CompilerParams(
            dimension_semantics=("arbitrary",), vmem_limit_bytes=VMEM_LIMIT),
    )(xcol, dev['wcol'], dev['g1'], dev['b1'])

    # ---- pass 2: GAP + attention head + RadixSoftmax ----
    kern2 = functools.partial(_gap_attention_kernel, hw=HW,
                              tiles_per_image=tiles_per_image, radix=radix, cp=CP)
    atten = pl.pallas_call(
        kern2,
        grid=(num_tiles,),
        in_specs=[row_spec(crt_pad),
                  const_spec((1, crt_pad)), const_spec((1, crt_pad)),
                  const_spec((CP, IP)), const_spec((1, IP)),
                  const_spec((1, IP)), const_spec((1, IP)),
                  const_spec((IP, crt_pad)), const_spec((1, crt_pad))],
        out_specs=const_spec((B, crt_pad)),
        out_shape=jax.ShapeDtypeStruct((B, crt_pad), jnp.float32),
        scratch_shapes=[pltpu.VMEM((B, CP), jnp.float32)],
        compiler_params=pltpu.CompilerParams(
            dimension_semantics=("arbitrary",), vmem_limit_bytes=VMEM_LIMIT),
    )(y_full, scale, shift, dev['w1'], dev['cb1'],
      dev['g2'], dev['b2'], dev['w2'], dev['cb2'])

    # ---- pass 3: attention-weighted radix sum, lane-dense output ----
    kern3 = functools.partial(_apply_attention_kernel,
                              tiles_per_image=tiles_per_image, radix=radix, cp=CP)
    out2d = pl.pallas_call(
        kern3,
        grid=(num_tiles,),
        in_specs=[row_spec(crt_pad),
                  const_spec((1, crt_pad)), const_spec((1, crt_pad)),
                  const_spec((B, crt_pad))],
        out_specs=pl.BlockSpec((TILE, CP), lambda i: (i, 0)),
        out_shape=jax.ShapeDtypeStruct((N, CP), jnp.float32),
        compiler_params=pltpu.CompilerParams(
            dimension_semantics=("parallel",), vmem_limit_bytes=VMEM_LIMIT),
    )(y_full, scale, shift, atten)

    return out2d.reshape(B, H, W, CP)[:, :, :, :channels].transpose(0, 3, 1, 2)


def make_params(key, c_in, channels, radix, cardinality, reduction_factor):
    crt = channels * radix
    inner = crt // reduction_factor
    groups1 = cardinality * radix
    ks = jax.random.split(key, 9)
    return {
        'w_conv': 0.3 * jax.random.normal(ks[0], (crt, c_in // groups1, 3, 3), jnp.float32),
        'g1': 1.0 + 0.1 * jax.random.normal(ks[1], (crt,), jnp.float32),
        'b1': 0.1 * jax.random.normal(ks[2], (crt,), jnp.float32),
        'w1': 0.5 * jax.random.normal(ks[3], (inner, channels // cardinality, 1, 1), jnp.float32),
        'b1c': 0.1 * jax.random.normal(ks[4], (inner,), jnp.float32),
        'g2': 1.0 + 0.1 * jax.random.normal(ks[5], (inner,), jnp.float32),
        'b2bn': 0.1 * jax.random.normal(ks[6], (inner,), jnp.float32),
        'w2': 0.5 * jax.random.normal(ks[7], (crt, inner // cardinality, 1, 1), jnp.float32),
        'b2c': 0.1 * jax.random.normal(ks[8], (crt,), jnp.float32),
    }


def reference_forward(x, p, *, radix, cardinality):
    """Pure-JAX NCHW reference mirroring the PyTorch forward (f32 everywhere)."""
    B = x.shape[0]
    dn = ('NCHW', 'OIHW', 'NCHW')
    y = lax.conv_general_dilated(x, p['w_conv'], (1, 1), 'SAME', dimension_numbers=dn,
                                 feature_group_count=cardinality * radix)
    mu = y.mean(axis=(0, 2, 3), keepdims=True)
    var = ((y - mu) ** 2).mean(axis=(0, 2, 3), keepdims=True)
    y = (y - mu) / jnp.sqrt(var + EPS) * p['g1'][None, :, None, None] + p['b1'][None, :, None, None]
    y = jnp.maximum(y, 0.0)
    channels = y.shape[1] // radix
    if radix > 1:
        splitted = jnp.split(y, radix, axis=1)
        concat = sum(splitted)
    else:
        splitted = [y]
        concat = y
    gap = concat.mean(axis=(2, 3), keepdims=True)
    a1 = lax.conv_general_dilated(gap, p['w1'], (1, 1), 'VALID', dimension_numbers=dn,
                                  feature_group_count=cardinality) + p['b1c'][None, :, None, None]
    m1 = a1.mean(axis=(0, 2, 3), keepdims=True)
    v1 = ((a1 - m1) ** 2).mean(axis=(0, 2, 3), keepdims=True)
    a1 = (a1 - m1) / jnp.sqrt(v1 + EPS) * p['g2'][None, :, None, None] + p['b2bn'][None, :, None, None]
    a1 = jnp.maximum(a1, 0.0)
    logits = lax.conv_general_dilated(a1, p['w2'], (1, 1), 'VALID', dimension_numbers=dn,
                                      feature_group_count=cardinality) + p['b2c'][None, :, None, None]
    if radix > 1:
        t = logits.reshape(B, cardinality, radix, -1).transpose(0, 2, 1, 3)
        t = jax.nn.softmax(t, axis=1)
        att = t.reshape(B, -1)[:, :, None, None]
        attens = jnp.split(att, radix, axis=1)
        result = sum(a * s for a, s in zip(attens, splitted))
    else:
        result = jax.nn.sigmoid(logits) * y
    return result


if __name__ == "__main__":
    B, c_in, H, W = 2, 4, 16, 16
    channels, radix, cardinality, reduction_factor = 4, 2, 2, 1

    key = jax.random.PRNGKey(0)
    kx, kp = jax.random.split(key)
    x = jax.random.normal(kx, (B, c_in, H, W), jnp.float32)
    params = make_params(kp, c_in, channels, radix, cardinality, reduction_factor)

    out = split_attention_conv(x, params, radix=radix, cardinality=cardinality, channels=channels)
    out = jax.block_until_ready(out)

    ref = jax.block_until_ready(reference_forward(x, params, radix=radix, cardinality=cardinality))
    assert out.shape == (B, channels, H, W), out.shape
    max_err = float(jnp.max(jnp.abs(out - ref)))
    # bf16 matmul inputs + bf16 intermediate storage + approx reciprocal -> relaxed tolerance
    assert jnp.allclose(out, ref, rtol=3e-2, atol=2e-2), f"max abs err {max_err}"
    print("KERNEL_OK")
</pallas_src>

<mosaic_0001>
module attributes {stable_mosaic.version = 11 : i64} {
  func.func @_conv_stats_kernel(%arg0: i32, %arg1: memref<256x36xbf16, #tpu.memory_space<vmem>>, %arg2: memref<36x256xbf16, #tpu.memory_space<vmem>>, %arg3: memref<1x256xf32, #tpu.memory_space<vmem>>, %arg4: memref<1x256xf32, #tpu.memory_space<vmem>>, %arg5: memref<256x256xbf16, #tpu.memory_space<vmem>>, %arg6: memref<1x256xf32, #tpu.memory_space<vmem>>, %arg7: memref<1x256xf32, #tpu.memory_space<vmem>>) attributes {dimension_semantics = [#tpu.dimension_semantics<arbitrary>], iteration_bounds = array<i64: 2>, scalar_prefetch = 0 : i64, scratch_operands = 0 : i64, tpu.core_type = #tpu.core_type<tc>, window_params = [{transform_indices = @transform_0, window_bounds = array<i64: 256, 36>}, {pipeline_mode = #tpu.pipeline_mode<synchronous>, transform_indices = @transform_1, window_bounds = array<i64: 36, 256>}, {pipeline_mode = #tpu.pipeline_mode<synchronous>, transform_indices = @transform_2, window_bounds = array<i64: 1, 256>}, {pipeline_mode = #tpu.pipeline_mode<synchronous>, transform_indices = @transform_3, window_bounds = array<i64: 1, 256>}, {transform_indices = @transform_4, window_bounds = array<i64: 256, 256>}, {pipeline_mode = #tpu.pipeline_mode<synchronous>, transform_indices = @transform_5, window_bounds = array<i64: 1, 256>}, {pipeline_mode = #tpu.pipeline_mode<synchronous>, transform_indices = @transform_6, window_bounds = array<i64: 1, 256>}]} {
    %c0 = arith.constant 0 : index
    %c0_0 = arith.constant 0 : index
    %0 = vector.load %arg1[%c0, %c0_0] : memref<256x36xbf16, #tpu.memory_space<vmem>>, vector<256x36xbf16>
    %c0_1 = arith.constant 0 : index
    %c0_2 = arith.constant 0 : index
    %1 = vector.load %arg2[%c0_1, %c0_2] : memref<36x256xbf16, #tpu.memory_space<vmem>>, vector<36x256xbf16>
    %cst = arith.constant dense<0.000000e+00> : vector<256x256xf32>
    %2 = tpu.matmul %0, %1, %cst {dimension_numbers = #tpu.dot_dimension_numbers<[1], [0], [0], [1], [0, 0, 1, 1], [], []>} : vector<256x36xbf16>, vector<36x256xbf16>, vector<256x256xf32> -> vector<256x256xf32>
    %3 = arith.truncf %2 : vector<256x256xf32> to vector<256x256xbf16>
    %c0_3 = arith.constant 0 : index
    %c0_4 = arith.constant 0 : index
    %4 = vector.load %arg5[%c0_3, %c0_4] : memref<256x256xbf16, #tpu.memory_space<vmem>>, vector<256x256xbf16>
    tpu.vector_store %arg5[%c0_3, %c0_4], %3 {strides = array<i32>} : memref<256x256xbf16, #tpu.memory_space<vmem>>, vector<256x256xbf16>,
    %c0_i32 = arith.constant 0 : i32
    %5 = arith.cmpi eq, %arg0, %c0_i32 : i32
    %6 = arith.extui %5 : i1 to i32
    %c0_i32_5 = arith.constant 0 : i32
    %7 = arith.cmpi ne, %6, %c0_i32_5 : i32
    scf.if %7 {
      %cst_17 = arith.constant 0.000000e+00 : f32
      %22 = vector.broadcast %cst_17 : f32 to vector<1x256xf32>
      %c0_18 = arith.constant 0 : index
      %c0_19 = arith.constant 0 : index
      %23 = vector.load %arg6[%c0_18, %c0_19] : memref<1x256xf32, #tpu.memory_space<vmem>>, vector<1x256xf32>
      tpu.vector_store %arg6[%c0_18, %c0_19], %22 {strides = array<i32>} : memref<1x256xf32, #tpu.memory_space<vmem>>, vector<1x256xf32>,
      %cst_20 = arith.constant 0.000000e+00 : f32
      %24 = vector.broadcast %cst_20 : f32 to vector<1x256xf32>
      %c0_21 = arith.constant 0 : index
      %c0_22 = arith.constant 0 : index
      %25 = vector.load %arg7[%c0_21, %c0_22] : memref<1x256xf32, #tpu.memory_space<vmem>>, vector<1x256xf32>
      tpu.vector_store %arg7[%c0_21, %c0_22], %24 {strides = array<i32>} : memref<1x256xf32, #tpu.memory_space<vmem>>, vector<1x256xf32>,
    } else {
    }
    %c0_6 = arith.constant 0 : index
    %c0_7 = arith.constant 0 : index
    %8 = vector.load %arg6[%c0_6, %c0_7] : memref<1x256xf32, #tpu.memory_space<vmem>>, vector<1x256xf32>
    %cst_8 = arith.constant dense<0.000000e+00> : vector<256xf32>
    %9 = vector.multi_reduction <add>, %2, %cst_8 [0] : vector<256x256xf32> to vector<256xf32>
    %10 = vector.shape_cast %9 : vector<256xf32> to vector<1x256xf32>
    %11 = arith.addf %8, %10 : vector<1x256xf32>
    %c0_9 = arith.constant 0 : index
    %c0_10 = arith.constant 0 : index
    %12 = vector.load %arg6[%c0_9, %c0_10] : memref<1x256xf32, #tpu.memory_space<vmem>>, vector<1x256xf32>
    tpu.vector_store %arg6[%c0_9, %c0_10], %11 {strides = array<i32>} : memref<1x256xf32, #tpu.memory_space<vmem>>, vector<1x256xf32>,
    %c0_11 = arith.constant 0 : index
    %c0_12 = arith.constant 0 : index
    %13 = vector.load %arg7[%c0_11, %c0_12] : memref<1x256xf32, #tpu.memory_space<vmem>>, vector<1x256xf32>
    %14 = arith.mulf %2, %2 : vector<256x256xf32>
    %cst_13 = arith.constant dense<0.000000e+00> : vector<256xf32>
    %15 = vector.multi_reduction <add>, %14, %cst_13 [0] : vector<256x256xf32> to vector<256xf32>
    %16 = vector.shape_cast %15 : vector<256xf32> to vector<1x256xf32>
    %17 = arith.addf %13, %16 : vector<1x256xf32>
    %c0_14 = arith.constant 0 : index
    %c0_15 = arith.constant 0 : index
    %18 = vector.load %arg7[%c0_14, %c0_15] : memref<1x256xf32, #tpu.memory_space<vmem>>, vector<1x256xf32>
    tpu.vector_store %arg7[%c0_14, %c0_15], %17 {strides = array<i32>} : memref<1x256xf32, #tpu.memory_space<vmem>>, vector<1x256xf32>,
    %c1_i32 = arith.constant 1 : i32
    %19 = arith.cmpi eq, %arg0, %c1_i32 : i32
    %20 = arith.extui %19 : i1 to i32
    %c0_i32_16 = arith.constant 0 : i32
    %21 = arith.cmpi ne, %20, %c0_i32_16 : i32
    scf.if %21 {
      %c0_17 = arith.constant 0 : index
      %c0_18 = arith.constant 0 : index
      %22 = vector.load %arg6[%c0_17, %c0_18] : memref<1x256xf32, #tpu.memory_space<vmem>>, vector<1x256xf32>
      %cst_19 = arith.constant 0.001953125 : f32
      %23 = vector.broadcast %cst_19 : f32 to vector<1x256xf32>
      %24 = arith.mulf %22, %23 : vector<1x256xf32>
      %c0_20 = arith.constant 0 : index
      %c0_21 = arith.constant 0 : index
      %25 = vector.load %arg7[%c0_20, %c0_21] : memref<1x256xf32, #tpu.memory_space<vmem>>, vector<1x256xf32>
      %cst_22 = arith.constant 0.001953125 : f32
      %26 = vector.broadcast %cst_22 : f32 to vector<1x256xf32>
      %27 = arith.mulf %25, %26 : vector<1x256xf32>
      %28 = arith.mulf %24, %24 : vector<1x256xf32>
      %29 = arith.subf %27, %28 : vector<1x256xf32>
      %c0_23 = arith.constant 0 : index
      %c0_24 = arith.constant 0 : index
      %30 = vector.load %arg3[%c0_23, %c0_24] : memref<1x256xf32, #tpu.memory_space<vmem>>, vector<1x256xf32>
      %cst_25 = arith.constant 9.99999974E-6 : f32
      %31 = vector.broadcast %cst_25 : f32 to vector<1x256xf32>
      %32 = arith.addf %29, %31 : vector<1x256xf32>
      %33 = math.rsqrt %32 : vector<1x256xf32>
      %34 = arith.mulf %30, %33 : vector<1x256xf32>
      %c0_26 = arith.constant 0 : index
      %c0_27 = arith.constant 0 : index
      %35 = vector.load %arg6[%c0_26, %c0_27] : memref<1x256xf32, #tpu.memory_space<vmem>>, vector<1x256xf32>
      tpu.vector_store %arg6[%c0_26, %c0_27], %34 {strides = array<i32>} : memref<1x256xf32, #tpu.memory_space<vmem>>, vector<1x256xf32>,
      %c0_28 = arith.constant 0 : index
      %c0_29 = arith.constant 0 : index
      %36 = vector.load %arg4[%c0_28, %c0_29] : memref<1x256xf32, #tpu.memory_space<vmem>>, vector<1x256xf32>
      %37 = arith.mulf %24, %34 : vector<1x256xf32>
      %38 = arith.subf %36, %37 : vector<1x256xf32>
      %c0_30 = arith.constant 0 : index
      %c0_31 = arith.constant 0 : index
      %39 = vector.load %arg7[%c0_30, %c0_31] : memref<1x256xf32, #tpu.memory_space<vmem>>, vector<1x256xf32>
      tpu.vector_store %arg7[%c0_30, %c0_31], %38 {strides = array<i32>} : memref<1x256xf32, #tpu.memory_space<vmem>>, vector<1x256xf32>,
    } else {
    }
    return
  }
  func.func @transform_0(%arg0: i32) -> (i32, i32) {
    %c0_i32 = arith.constant 0 : i32
    %c0_i32_0 = arith.constant 0 : i32
    return %arg0, %c0_i32 : i32, i32
  }
  func.func @transform_1(%arg0: i32) -> (i32, i32) {
    %c0_i32 = arith.constant 0 : i32
    %c0_i32_0 = arith.constant 0 : i32
    %c0_i32_1 = arith.constant 0 : i32
    return %c0_i32, %c0_i32_0 : i32, i32
  }
  func.func @transform_2(%arg0: i32) -> (i32, i32) {
    %c0_i32 = arith.constant 0 : i32
    %c0_i32_0 = arith.constant 0 : i32
    %c0_i32_1 = arith.constant 0 : i32
    return %c0_i32, %c0_i32_0 : i32, i32
  }
  func.func @transform_3(%arg0: i32) -> (i32, i32) {
    %c0_i32 = arith.constant 0 : i32
    %c0_i32_0 = arith.constant 0 : i32
    %c0_i32_1 = arith.constant 0 : i32
    return %c0_i32, %c0_i32_0 : i32, i32
  }
  func.func @transform_4(%arg0: i32) -> (i32, i32) {
    %c0_i32 = arith.constant 0 : i32
    %c0_i32_0 = arith.constant 0 : i32
    return %arg0, %c0_i32 : i32, i32
  }
  func.func @transform_5(%arg0: i32) -> (i32, i32) {
    %c0_i32 = arith.constant 0 : i32
    %c0_i32_0 = arith.constant 0 : i32
    %c0_i32_1 = arith.constant 0 : i32
    return %c0_i32, %c0_i32_0 : i32, i32
  }
  func.func @transform_6(%arg0: i32) -> (i32, i32) {
    %c0_i32 = arith.constant 0 : i32
    %c0_i32_0 = arith.constant 0 : i32
    %c0_i32_1 = arith.constant 0 : i32
    return %c0_i32, %c0_i32_0 : i32, i32
  }
}

</mosaic_0001>

<llo_original>
// kernel: tpu_custom_call.1
$region0: #{tpu_custom_call.1}
  #allocation0 [shape = 'u32[]', space=smem, size = 0x4, offset = 0x4, fixed_abs, tag = 'smem constant byte address 0x4 - core index']
  #allocation1 [shape = 'u32[144,128]{1,0:T(1,128)}', space=vmem, size = 0x12000, scoped, tag = 'internal scratch']
  %s0 = inlined_call_operand.vmem [shape: bf16[512,36], index: 0, kind: input, shape index: {}]
  %s1 = inlined_call_operand.vmem [shape: bf16[36,256], index: 1, kind: input, shape index: {}]
  %s2 = inlined_call_operand.vmem [shape: f32[1,256], index: 2, kind: input, shape index: {}]
  %s3 = inlined_call_operand.vmem [shape: f32[1,256], index: 3, kind: input, shape index: {}]
  %s4 = inlined_call_operand.hbm [shape: bf16[512,256], index: 4, kind: output, shape index: {0}]
  %s5 = inlined_call_operand.hbm [shape: f32[1,256], index: 5, kind: output, shape index: {1}]
  %s6 = inlined_call_operand.hbm [shape: f32[1,256], index: 6, kind: output, shape index: {2}]
  %7 = xla_tuple %s4, %s5, %s6
  %s8 = sld [smem:[#allocation0]]
  $region73: #{tpu_custom_call.1} parent=0
    _
  %s10 = ssub.s32 1, %s8
  %s11 = scalar_select 0, %s10, %s8
  $region1: #{tpu_custom_call.1} parent=0
    #allocation2 [shape = 'u8[262144]{0}', space=vmem, size = 0x40000, scoped, tag = 'output window, operand 0']
    #allocation3 [shape = 's32[2]{0}', space=sflag, size = 0x8, scoped, tag = 'scoped memory for tpu_custom_call.1']
    #allocation4 [shape = 'u8[1024]{0}', space=vmem, size = 0x400, scoped, tag = 'output window, operand 1, single buffered']
    #allocation5 [shape = 's32[1]{0}', space=sflag, size = 0x4, scoped, tag = 'scoped memory for tpu_custom_call.1']
    #allocation6 [shape = 'u8[1024]{0}', space=vmem, size = 0x400, scoped, tag = 'output window, operand 2, single buffered']
    %12 = vsyncpa [#allocation3], 0
    %s13 = scalar_lea.sflag [#allocation3], 1
    %14 = vsyncpa %s13, 0
    %15 = vsyncpa [#allocation5], 0
    loop: start=0, step=1, limit=4
    $region2: #{tpu_custom_call.1} parent=1 // loop_pre_header
      _
    $region3: #{tpu_custom_call.1} parent=1 // loop_header
      %s17 = sphi 0, %s21
      %p18 = scmp.ge.s32.totalorder %s17, 4
      %s27 = sphi 0, %s29
      %s30 = sphi 0, %s27
      %s31 = sphi 0, %s30
      %s47 = sphi 0, %s31
      %s51 = sphi 0, %s51
      %s53 = sphi 0, %s51
      %s54 = sphi 0, %s53
      %s68 = sphi 0, %s54
      %s72 = sphi 0, %s72
      %s74 = sphi 0, %s72
      %s75 = sphi 0, %s74
      %s89 = sphi 0, %s75
      %s93 = sphi 0, %s93
      %s95 = sphi 0, %s93
      %s96 = sphi 0, %s95
      %s110 = sphi 0, %s96
      %s116 = sphi 0, %s118
      %s119 = sphi 0, %s116
      %s120 = sphi 0, %s119
      %s136 = sphi 0, %s120
      %s140 = sphi 0, %s140
      %s142 = sphi 0, %s140
      %s143 = sphi 0, %s142
      %s157 = sphi 0, %s143
      %s161 = sphi 0, %s161
      %s163 = sphi 0, %s161
      %s164 = sphi 0, %s163
      %s178 = sphi 0, %s164
    $region4: #{tpu_custom_call.1} parent=1 // loop_header_branch
      %20 = sbr.rel (%p18) target = $region8
    $region5: #{tpu_custom_call.1} parent=1 // loop_body
      %s22 = ssub.s32 %s17, 1
      %s23 = ssub.s32 %s17, 2
      %s24 = sadd.s32 %s17, 1
      %s25 = ssub.s32 %s17, %s24
      %p26 = scmp.eq.s32.totalorder %s25, 0
      %s28 = sadd.s32 %s27, 1
      %s29 = scalar_select %p26, %s27, %s28
      %p32 = pneg %p26
      %p33 = scmp.eq.s32.totalorder %s17, 1
      %p34 = por %p32, %p33
      %p35 = scmp.ne.s32.totalorder %s27, %s30
      %p36 = scmp.eq.s32.totalorder %s17, 0
      %p37 = por %p35, %p36
      %p38 = scmp.ne.s32.totalorder %s27, %s30
      %p39 = scmp.eq.s32.totalorder %s22, 1
      %p40 = por %p38, %p39
      %p41 = scmp.ne.s32.totalorder %s30, %s31
      %p42 = scmp.eq.s32.totalorder %s22, 0
      %p43 = por %p41, %p42
      %p44 = scmp.ne.s32.totalorder %s30, %s31
      %p45 = scmp.eq.s32.totalorder %s23, 1
      %p46 = por %p44, %p45
      %p48 = scmp.ne.s32.totalorder %s31, %s47
      %p49 = scmp.eq.s32.totalorder %s23, 0
      %p50 = por %p48, %p49
      %s52 = sadd.s32 %s51, 1
      %p55 = scmp.eq.s32.totalorder %s17, 1
      %p56 = scmp.ne.s32.totalorder %s51, %s53
      %p57 = scmp.eq.s32.totalorder %s17, 0
      %p58 = por %p56, %p57
      %p59 = scmp.ne.s32.totalorder %s51, %s53
      %p60 = scmp.eq.s32.totalorder %s22, 1
      %p61 = por %p59, %p60
      %p62 = scmp.ne.s32.totalorder %s53, %s54
      %p63 = scmp.eq.s32.totalorder %s22, 0
      %p64 = por %p62, %p63
      %p65 = scmp.ne.s32.totalorder %s53, %s54
      %p66 = scmp.eq.s32.totalorder %s23, 1
      %p67 = por %p65, %p66
      %p69 = scmp.ne.s32.totalorder %s54, %s68
      %p70 = scmp.eq.s32.totalorder %s23, 0
      %p71 = por %p69, %p70
      %s73 = sadd.s32 %s72, 1
      %p76 = scmp.eq.s32.totalorder %s17, 1
      %p77 = scmp.ne.s32.totalorder %s72, %s74
      %p78 = scmp.eq.s32.totalorder %s17, 0
      %p79 = por %p77, %p78
      %p80 = scmp.ne.s32.totalorder %s72, %s74
      %p81 = scmp.eq.s32.totalorder %s22, 1
      %p82 = por %p80, %p81
      %p83 = scmp.ne.s32.totalorder %s74, %s75
      %p84 = scmp.eq.s32.totalorder %s22, 0
      %p85 = por %p83, %p84
      %p86 = scmp.ne.s32.totalorder %s74, %s75
      %p87 = scmp.eq.s32.totalorder %s23, 1
      %p88 = por %p86, %p87
      %p90 = scmp.ne.s32.totalorder %s75, %s89
      %p91 = scmp.eq.s32.totalorder %s23, 0
      %p92 = por %p90, %p91
      %s94 = sadd.s32 %s93, 1
      %p97 = scmp.eq.s32.totalorder %s17, 1
      %p98 = scmp.ne.s32.totalorder %s93, %s95
      %p99 = scmp.eq.s32.totalorder %s17, 0
      %p100 = por %p98, %p99
      %p101 = scmp.ne.s32.totalorder %s93, %s95
      %p102 = scmp.eq.s32.totalorder %s22, 1
      %p103 = por %p101, %p102
      %p104 = scmp.ne.s32.totalorder %s95, %s96
      %p105 = scmp.eq.s32.totalorder %s22, 0
      %p106 = por %p104, %p105
      %p107 = scmp.ne.s32.totalorder %s95, %s96
      %p108 = scmp.eq.s32.totalorder %s23, 1
      %p109 = por %p107, %p108
      %p111 = scmp.ne.s32.totalorder %s96, %s110
      %p112 = scmp.eq.s32.totalorder %s23, 0
      %p113 = por %p111, %p112
      %s114 = ssub.s32 %s17, %s24
      %p115 = scmp.eq.s32.totalorder %s114, 0
      %s117 = sadd.s32 %s116, 1
      %s118 = scalar_select %p115, %s116, %s117
      %p121 = pneg %p115
      %p122 = scmp.eq.s32.totalorder %s17, 1
      %p123 = por %p121, %p122
      %p124 = scmp.ne.s32.totalorder %s116, %s119
      %p125 = scmp.eq.s32.totalorder %s17, 0
      %p126 = por %p124, %p125
      %p127 = scmp.ne.s32.totalorder %s116, %s119
      %p128 = scmp.eq.s32.totalorder %s22, 1
      %p129 = por %p127, %p128
      %p130 = scmp.ne.s32.totalorder %s119, %s120
      %p131 = scmp.eq.s32.totalorder %s22, 0
      %p132 = por %p130, %p131
      %p133 = scmp.ne.s32.totalorder %s119, %s120
      %p134 = scmp.eq.s32.totalorder %s23, 1
      %p135 = por %p133, %p134
      %p137 = scmp.ne.s32.totalorder %s120, %s136
      %p138 = scmp.eq.s32.totalorder %s23, 0
      %p139 = por %p137, %p138
      %s141 = sadd.s32 %s140, 1
      %p144 = scmp.eq.s32.totalorder %s17, 1
      %p145 = scmp.ne.s32.totalorder %s140, %s142
      %p146 = scmp.eq.s32.totalorder %s17, 0
      %p147 = por %p145, %p146
      %p148 = scmp.ne.s32.totalorder %s140, %s142
      %p149 = scmp.eq.s32.totalorder %s22, 1
      %p150 = por %p148, %p149
      %p151 = scmp.ne.s32.totalorder %s142, %s143
      %p152 = scmp.eq.s32.totalorder %s22, 0
      %p153 = por %p151, %p152
      %p154 = scmp.ne.s32.totalorder %s142, %s143
      %p155 = scmp.eq.s32.totalorder %s23, 1
      %p156 = por %p154, %p155
      %p158 = scmp.ne.s32.totalorder %s143, %s157
      %p159 = scmp.eq.s32.totalorder %s23, 0
      %p160 = por %p158, %p159
      %s162 = sadd.s32 %s161, 1
      %p165 = scmp.eq.s32.totalorder %s17, 1
      %p166 = scmp.ne.s32.totalorder %s161, %s163
      %p167 = scmp.eq.s32.totalorder %s17, 0
      %p168 = por %p166, %p167
      %p169 = scmp.ne.s32.totalorder %s161, %s163
      %p170 = scmp.eq.s32.totalorder %s22, 1
      %p171 = por %p169, %p170
      %p172 = scmp.ne.s32.totalorder %s163, %s164
      %p173 = scmp.eq.s32.totalorder %s22, 0
      %p174 = por %p172, %p173
      %p175 = scmp.ne.s32.totalorder %s163, %s164
      %p176 = scmp.eq.s32.totalorder %s23, 1
      %p177 = por %p175, %p176
      %p179 = scmp.ne.s32.totalorder %s164, %s178
      %p180 = scmp.eq.s32.totalorder %s23, 0
      %p181 = por %p179, %p180
      %p182 = scmp.le.s32.totalorder 1, %s17
      %p183 = scmp.lt.s32.totalorder %s17, 3
      %p184 = pnand %p182, %p183
      %p185 = pneg %p184
      // Predicated region
      $region9: #{tpu_custom_call.1} parent=5 // pred_check
        _
      $region10: #{tpu_custom_call.1} parent=5 // pred_check_branch
        %187 = sbr.rel (%p184) target = $region12
      $region11: #{tpu_custom_call.1} parent=5 // pred_region
        %s188 = ssub.s32 %s17, 1
        // Predicated region
        $region13: #{tpu_custom_call.1} parent=11 // pred_check
          %p189 = pneg %p64
        $region14: #{tpu_custom_call.1} parent=11 // pred_check_branch
          %191 = sbr.rel (%p189) target = $region16
        $region15: #{tpu_custom_call.1} parent=11 // pred_region
          _
        $region16: #{tpu_custom_call.1} parent=11 // pred_fallthru
          _
        // Predicated region
        $region17: #{tpu_custom_call.1} parent=11 // pred_check
          %p192 = pneg %p85
        $region18: #{tpu_custom_call.1} parent=11 // pred_check_branch
          %194 = sbr.rel (%p192) target = $region20
        $region19: #{tpu_custom_call.1} parent=11 // pred_region
          _
        $region20: #{tpu_custom_call.1} parent=11 // pred_fallthru
          _
        // Predicated region
        $region21: #{tpu_custom_call.1} parent=11 // pred_check
          %p195 = pneg %p106
        $region22: #{tpu_custom_call.1} parent=11 // pred_check_branch
          %197 = sbr.rel (%p195) target = $region24
        $region23: #{tpu_custom_call.1} parent=11 // pred_region
          _
        $region24: #{tpu_custom_call.1} parent=11 // pred_fallthru
          _
      $region12: #{tpu_custom_call.1} parent=5 // pred_fallthru
        _
      %p198 = scmp.lt.s32.totalorder %s17, 2
      // Predicated region
      $region25: #{tpu_custom_call.1} parent=5 // pred_check
        %p199 = pneg %p198
      $region26: #{tpu_custom_call.1} parent=5 // pred_check_branch
        %201 = sbr.rel (%p199) target = $region28
      $region27: #{tpu_custom_call.1} parent=5 // pred_region
        // Predicated region
        $region29: #{tpu_custom_call.1} parent=27 // pred_check
          %p202 = pneg %p37
        $region30: #{tpu_custom_call.1} parent=27 // pred_check_branch
          %204 = sbr.rel (%p202) target = $region32
        $region31: #{tpu_custom_call.1} parent=27 // pred_region
          %s205 = smul.u32 32, %s17
          %p206 = scmp.lt.s32.totalorder %s205, 63
          %s207 = scalar_select %p206, %s205, 63
          %s208 = smul.addr %s207, 4
          %s209 = scalar_lea.vmem %s0, %s208
          %s210 = smul.u32 32, %s17
        $region32: #{tpu_custom_call.1} parent=27 // pred_fallthru
          _
      $region28: #{tpu_custom_call.1} parent=5 // pred_fallthru
        _
      %p211 = scmp.le.s32.totalorder 1, %s17
      %p212 = scmp.lt.s32.totalorder %s17, 3
      %p213 = pnand %p211, %p212
      %p214 = pneg %p213
      // Predicated region
      $region33: #{tpu_custom_call.1} parent=5 // pred_check
        _
      $region34: #{tpu_custom_call.1} parent=5 // pred_check_branch
        %216 = sbr.rel (%p213) target = $region36
      $region35: #{tpu_custom_call.1} parent=5 // pred_region
        %s217 = ssub.s32 %s17, 1
        %s218 = smul.u32 32, %s22
        %p219 = scmp.lt.s32.totalorder %s218, 63
        %s220 = scalar_select %p219, %s218, 63
        %s221 = smul.addr %s220, 4
        %s222 = scalar_lea.vmem %s0, %s221
        %p223 = pneg %p43
        %p224 = pneg %p40
        %p225 = pneg %p64
        %p226 = pneg %p61
        %p227 = pneg %p85
        %p228 = pneg %p82
        %p229 = pneg %p106
        %p230 = pneg %p103
        %p231 = pneg %p132
        %p232 = pneg %p129
        %s233 = sand.u32 %s119, 1
        %s234 = scalar_lea.sflag [#allocation3], %s233
        %s235 = sand.u32 %s119, 1
        %s236 = smul.addr %s235, 256
        %s237 = scalar_lea.vmem [#allocation2], %s236
        %p238 = pneg %p153
        %p239 = pneg %p150
        %p240 = pneg %p174
        %p241 = pneg %p171
        %s242 = smul.u32 32, %s22
        %p243 = scmp.lt.s32.totalorder %s242, 63
        %s244 = scalar_select %p243, %s242, 63
        %s245 = smul.addr %s244, 4
        %s246 = scalar_lea.vmem %s0, %s245
        %s247 = smul.u32 32, %s22
        %s248 = smul.u32 32, %s22
        %v250 = vld [vmem:[%s246] sm:$0xf]
        %v251 = vld [vmem:[%s246 + $0x4] sm:$0xf]
        %v252 = vld [vmem:[%s246 + $0x8] sm:$0xf]
        %v253 = vld [vmem:[%s246 + $0xc] sm:$0xf]
        %v254 = vld [vmem:[%s246 + $0x10] sm:$0xf]
        %v255 = vld [vmem:[%s246 + $0x14] sm:$0xf]
        %v256 = vld [vmem:[%s246 + $0x18] sm:$0xf]
        %v257 = vld [vmem:[%s246 + $0x1c] sm:$0xf]
        %v258 = vld [vmem:[%s246 + $0x20] sm:$0xf]
        %v259 = vld [vmem:[%s246 + $0x24] sm:$0xf]
        %v260 = vld [vmem:[%s246 + $0x28] sm:$0xf]
        %v261 = vld [vmem:[%s246 + $0x2c] sm:$0xf]
        %v262 = vld [vmem:[%s246 + $0x30] sm:$0xf]
        %v263 = vld [vmem:[%s246 + $0x34] sm:$0xf]
        %v264 = vld [vmem:[%s246 + $0x38] sm:$0xf]
        %v265 = vld [vmem:[%s246 + $0x3c] sm:$0xf]
        %v266 = vld [vmem:[%s246 + $0x40] sm:$0xf]
        %v267 = vld [vmem:[%s246 + $0x44] sm:$0xf]
        %v268 = vld [vmem:[%s246 + $0x48] sm:$0xf]
        %v269 = vld [vmem:[%s246 + $0x4c] sm:$0xf]
        %v270 = vld [vmem:[%s246 + $0x50] sm:$0xf]
        %v271 = vld [vmem:[%s246 + $0x54] sm:$0xf]
        %v272 = vld [vmem:[%s246 + $0x58] sm:$0xf]
        %v273 = vld [vmem:[%s246 + $0x5c] sm:$0xf]
        %v274 = vld [vmem:[%s246 + $0x60] sm:$0xf]
        %v275 = vld [vmem:[%s246 + $0x64] sm:$0xf]
        %v276 = vld [vmem:[%s246 + $0x68] sm:$0xf]
        %v277 = vld [vmem:[%s246 + $0x6c] sm:$0xf]
        %v278 = vld [vmem:[%s246 + $0x70] sm:$0xf]
        %v279 = vld [vmem:[%s246 + $0x74] sm:$0xf]
        %v280 = vld [vmem:[%s246 + $0x78] sm:$0xf]
        %v281 = vld [vmem:[%s246 + $0x7c] sm:$0xf]
        %v282 = vld [vmem:[%s1] sm:$0xff]
        %v283 = vld [vmem:[%s1 + $0x8] sm:$0xff]
        %v284 = vld [vmem:[%s1 + $0x10] sm:$0xff]
        %v285 = vld [vmem:[%s1 + $0x18] sm:$0xff]
        %v286 = vld [vmem:[%s1 + $0x20] sm:$0x33]
        %v319 = vunpack.c.l.b16 %v250
        %v320 = vunpack.c.l.b16 %v251
        %v321 = vunpack.c.l.b16 %v252
        %v322 = vunpack.c.l.b16 %v253
        %v323 = vunpack.c.l.b16 %v254
        %v324 = vunpack.c.l.b16 %v255
        %v325 = vunpack.c.l.b16 %v256
        %v326 = vunpack.c.l.b16 %v257
        %v327 = vunpack.c.l.b16 %v258
        %v328 = vunpack.c.l.b16 %v259
        %v329 = vunpack.c.l.b16 %v260
        %v330 = vunpack.c.l.b16 %v261
        %v331 = vunpack.c.l.b16 %v262
        %v332 = vunpack.c.l.b16 %v263
        %v333 = vunpack.c.l.b16 %v264
        %v334 = vunpack.c.l.b16 %v265
        %v335 = vunpack.c.l.b16 %v266
        %v336 = vunpack.c.l.b16 %v267
        %v337 = vunpack.c.l.b16 %v268
        %v338 = vunpack.c.l.b16 %v269
        %v339 = vunpack.c.l.b16 %v270
        %v340 = vunpack.c.l.b16 %v271
        %v341 = vunpack.c.l.b16 %v272
        %v342 = vunpack.c.l.b16 %v273
        %v343 = vunpack.c.l.b16 %v274
        %v344 = vunpack.c.l.b16 %v275
        %v345 = vunpack.c.l.b16 %v276
        %v346 = vunpack.c.l.b16 %v277
        %v347 = vunpack.c.l.b16 %v278
        %v348 = vunpack.c.l.b16 %v279
        %v349 = vunpack.c.l.b16 %v280
        %v350 = vunpack.c.l.b16 %v281
        %v351 = vpack.c.b16 %v320, %v319
        %v352 = vpack.c.b16 %v322, %v321
        %v353 = vpack.c.b16 %v324, %v323
        %v354 = vpack.c.b16 %v326, %v325
        %v355 = vpack.c.b16 %v328, %v327
        %v356 = vpack.c.b16 %v330, %v329
        %v357 = vpack.c.b16 %v332, %v331
        %v358 = vpack.c.b16 %v334, %v333
        %v359 = vpack.c.b16 %v336, %v335
        %v360 = vpack.c.b16 %v338, %v337
        %v361 = vpack.c.b16 %v340, %v339
        %v362 = vpack.c.b16 %v342, %v341
        %v363 = vpack.c.b16 %v344, %v343
        %v364 = vpack.c.b16 %v346, %v345
        %v365 = vpack.c.b16 %v348, %v347
        %v366 = vpack.c.b16 %v350, %v349
        %v372 = vunpack.c.l.b16 %v282
        %v373 = vunpack.c.h.b16 %v282
        %v374 = vunpack.c.l.b16 %v283
        %v375 = vunpack.c.h.b16 %v283
        %v376 = vunpack.c.l.b16 %v284
        %v377 = vunpack.c.h.b16 %v284
        %v378 = vunpack.c.l.b16 %v285
        %v379 = vunpack.c.h.b16 %v285
        %v380 = vunpack.c.l.b16 %v286
        %v381 = vunpack.c.h.b16 %v286
        %v382 = vpack.c.b16 %v374, %v372
        %v383 = vpack.c.b16 %v375, %v373
        %v384 = vpack.c.b16 %v378, %v376
        %v385 = vpack.c.b16 %v379, %v377
        %v386 = vpack.c.b16 %v380, %v380
        %v387 = vpack.c.b16 %v381, %v381
        %vm392 = vcmask 293888
        %v394 = vsel %vm392, %v351, 0
        %v397 = vsel %vm392, %v352, 0
        %v400 = vsel %vm392, %v353, 0
        %v403 = vsel %vm392, %v354, 0
        %v406 = vsel %vm392, %v355, 0
        %v409 = vsel %vm392, %v356, 0
        %v412 = vsel %vm392, %v357, 0
        %v415 = vsel %vm392, %v358, 0
        %v418 = vsel %vm392, %v359, 0
        %v421 = vsel %vm392, %v360, 0
        %v424 = vsel %vm392, %v361, 0
        %v427 = vsel %vm392, %v362, 0
        %v430 = vsel %vm392, %v363, 0
        %v433 = vsel %vm392, %v364, 0
        %v436 = vsel %vm392, %v365, 0
        %v439 = vsel %vm392, %v366, 0
        %vm441 = vcmask 1041408
        %v443 = vsel %vm441, %v386, 0
        %v446 = vsel %vm441, %v387, 0
        %448 = vmatprep.subr.bf16.mxu0 %v383
        %449 = vmatpush1.bf16.msra.mxu0 %v382
        %450 = vmatprep.subr.bf16.mxu0 %v385
        %451 = vmatpush1.bf16.msra.mxu0 %v384
        %452 = vmatprep.subr.bf16.mxu0 %v446
        %453 = vmatpush1.bf16.msra.mxu0 %v443
        %454 = vmatprep.subr.bf16.mxu0 0
        %455 = vmatpush1.bf16.msra.mxu0 0
        %456 = vmatprep.subr.bf16.mxu0 0
        %457 = vmatpush1.bf16.msra.mxu0 0
        %458 = vmatprep.subr.bf16.mxu0 0
        %459 = vmatpush1.bf16.msra.mxu0 0
        %460 = vmatprep.subr.bf16.mxu0 0
        %461 = vmatpush1.bf16.msra.mxu0 0
        %462 = vmatprep.subr.bf16.mxu0 0
        %463 = vmatpush1.bf16.msra.mxu0 0
        %464 = vmatprep.subr.bf16.mxu0 0
        %465 = vmatpush1.bf16.msra.mxu0 0
        %466 = vmatprep.subr.bf16.mxu0 0
        %467 = vmatpush1.bf16.msra.mxu0 0
        %468 = vmatprep.subr.bf16.mxu0 0
        %469 = vmatpush1.bf16.msra.mxu0 0
        %470 = vmatprep.subr.bf16.mxu0 0
        %471 = vmatpush1.bf16.msra.mxu0 0
        %472 = vmatprep.subr.bf16.mxu0 0
        %473 = vmatpush1.bf16.msra.mxu0 0
        %474 = vmatprep.subr.bf16.mxu0 0
        %475 = vmatpush1.bf16.msra.mxu0 0
        %476 = vmatprep.subr.bf16.mxu0 0
        %477 = vmatpush1.bf16.msra.mxu0 0
        %478 = vmatprep.subr.bf16.mxu0 0
        %479 = vmatpush1.bf16.msra.mxu0 0
        %480 = vmatprep.mubr.bf16.mxu0 0
        %481 = vmatmul.mubr.bf16.gmra.mrb[0].mxu0 %v394
        %v482 = vpop.f32.mrb[0].mxu0
        %v483 = vadd.f32 0.0, %v482
        %v484 = vpop.f32.mrb[0].mxu0
        %v485 = vadd.f32 0.0, %v484
        %v486 = vpop.f32.mrb[0].mxu0
        %v487 = vadd.f32 0.0, %v486
        %v488 = vpop.f32.mrb[0].mxu0
        %v489 = vadd.f32 0.0, %v488
        %490 = vmatprep.mubr.bf16.mxu0 0
        %491 = vmatmul.mubr.bf16.gmra.mrb[0].mxu0 %v397
        %v492 = vpop.f32.mrb[0].mxu0
        %v493 = vadd.f32 0.0, %v492
        %v494 = vpop.f32.mrb[0].mxu0
        %v495 = vadd.f32 0.0, %v494
        %v496 = vpop.f32.mrb[0].mxu0
        %v497 = vadd.f32 0.0, %v496
        %v498 = vpop.f32.mrb[0].mxu0
        %v499 = vadd.f32 0.0, %v498
        %500 = vmatprep.mubr.bf16.mxu0 0
        %501 = vmatmul.mubr.bf16.gmra.mrb[0].mxu0 %v400
        %v502 = vpop.f32.mrb[0].mxu0
        %v503 = vadd.f32 0.0, %v502
        %v504 = vpop.f32.mrb[0].mxu0
        %v505 = vadd.f32 0.0, %v504
        %v506 = vpop.f32.mrb[0].mxu0
        %v507 = vadd.f32 0.0, %v506
        %v508 = vpop.f32.mrb[0].mxu0
        %v509 = vadd.f32 0.0, %v508
        %510 = vmatprep.mubr.bf16.mxu0 0
        %511 = vmatmul.mubr.bf16.gmra.mrb[0].mxu0 %v403
        %v512 = vpop.f32.mrb[0].mxu0
        %v513 = vadd.f32 0.0, %v512
        %v514 = vpop.f32.mrb[0].mxu0
        %v515 = vadd.f32 0.0, %v514
        %v516 = vpop.f32.mrb[0].mxu0
        %v517 = vadd.f32 0.0, %v516
        %v518 = vpop.f32.mrb[0].mxu0
        %v519 = vadd.f32 0.0, %v518
        %520 = vmatprep.mubr.bf16.mxu0 0
        %521 = vmatmul.mubr.bf16.gmra.mrb[0].mxu0 %v406
        %v522 = vpop.f32.mrb[0].mxu0
        %v523 = vadd.f32 0.0, %v522
        %v524 = vpop.f32.mrb[0].mxu0
        %v525 = vadd.f32 0.0, %v524
        %v526 = vpop.f32.mrb[0].mxu0
        %v527 = vadd.f32 0.0, %v526
        %v528 = vpop.f32.mrb[0].mxu0
        %v529 = vadd.f32 0.0, %v528
        %530 = vmatprep.mubr.bf16.mxu0 0
        %531 = vmatmul.mubr.bf16.gmra.mrb[0].mxu0 %v409
        %v532 = vpop.f32.mrb[0].mxu0
        %v533 = vadd.f32 0.0, %v532
        %v534 = vpop.f32.mrb[0].mxu0
        %v535 = vadd.f32 0.0, %v534
        %v536 = vpop.f32.mrb[0].mxu0
        %v537 = vadd.f32 0.0, %v536
        %v538 = vpop.f32.mrb[0].mxu0
        %v539 = vadd.f32 0.0, %v538
        %540 = vmatprep.mubr.bf16.mxu0 0
        %541 = vmatmul.mubr.bf16.gmra.mrb[0].mxu0 %v412
        %v542 = vpop.f32.mrb[0].mxu0
        %v543 = vadd.f32 0.0, %v542
        %v544 = vpop.f32.mrb[0].mxu0
        %v545 = vadd.f32 0.0, %v544
        %v546 = vpop.f32.mrb[0].mxu0
        %v547 = vadd.f32 0.0, %v546
        %v548 = vpop.f32.mrb[0].mxu0
        %v549 = vadd.f32 0.0, %v548
        %550 = vmatprep.mubr.bf16.mxu0 0
        %551 = vmatmul.mubr.bf16.gmra.mrb[0].mxu0 %v415
        %v552 = vpop.f32.mrb[0].mxu0
        %v553 = vadd.f32 0.0, %v552
        %v554 = vpop.f32.mrb[0].mxu0
        %v555 = vadd.f32 0.0, %v554
        %v556 = vpop.f32.mrb[0].mxu0
        %v557 = vadd.f32 0.0, %v556
        %v558 = vpop.f32.mrb[0].mxu0
        %v559 = vadd.f32 0.0, %v558
        %560 = vmatprep.mubr.bf16.mxu0 0
        %561 = vmatmul.mubr.bf16.gmra.mrb[0].mxu0 %v418
        %v562 = vpop.f32.mrb[0].mxu0
        %v563 = vadd.f32 0.0, %v562
        %v564 = vpop.f32.mrb[0].mxu0
        %v565 = vadd.f32 0.0, %v564
        %v566 = vpop.f32.mrb[0].mxu0
        %v567 = vadd.f32 0.0, %v566
        %v568 = vpop.f32.mrb[0].mxu0
        %v569 = vadd.f32 0.0, %v568
        %570 = vmatprep.mubr.bf16.mxu0 0
        %571 = vmatmul.mubr.bf16.gmra.mrb[0].mxu0 %v421
        %v572 = vpop.f32.mrb[0].mxu0
        %v573 = vadd.f32 0.0, %v572
        %v574 = vpop.f32.mrb[0].mxu0
        %v575 = vadd.f32 0.0, %v574
        %v576 = vpop.f32.mrb[0].mxu0
        %v577 = vadd.f32 0.0, %v576
        %v578 = vpop.f32.mrb[0].mxu0
        %v579 = vadd.f32 0.0, %v578
        %580 = vmatprep.mubr.bf16.mxu0 0
        %581 = vmatmul.mubr.bf16.gmra.mrb[0].mxu0 %v424
        %v582 = vpop.f32.mrb[0].mxu0
        %v583 = vadd.f32 0.0, %v582
        %v584 = vpop.f32.mrb[0].mxu0
        %v585 = vadd.f32 0.0, %v584
        %v586 = vpop.f32.mrb[0].mxu0
        %v587 = vadd.f32 0.0, %v586
        %v588 = vpop.f32.mrb[0].mxu0
        %v589 = vadd.f32 0.0, %v588
        %590 = vmatprep.mubr.bf16.mxu0 0
        %591 = vmatmul.mubr.bf16.gmra.mrb[0].mxu0 %v427
        %v592 = vpop.f32.mrb[0].mxu0
        %v593 = vadd.f32 0.0, %v592
        %v594 = vpop.f32.mrb[0].mxu0
        %v595 = vadd.f32 0.0, %v594
        %v596 = vpop.f32.mrb[0].mxu0
        %v597 = vadd.f32 0.0, %v596
        %v598 = vpop.f32.mrb[0].mxu0
        %v599 = vadd.f32 0.0, %v598
        %600 = vmatprep.mubr.bf16.mxu0 0
        %601 = vmatmul.mubr.bf16.gmra.mrb[0].mxu0 %v430
        %v602 = vpop.f32.mrb[0].mxu0
        %v603 = vadd.f32 0.0, %v602
        %v604 = vpop.f32.mrb[0].mxu0
        %v605 = vadd.f32 0.0, %v604
        %v606 = vpop.f32.mrb[0].mxu0
        %v607 = vadd.f32 0.0, %v606
        %v608 = vpop.f32.mrb[0].mxu0
        %v609 = vadd.f32 0.0, %v608
        %610 = vmatprep.mubr.bf16.mxu0 0
        %611 = vmatmul.mubr.bf16.gmra.mrb[0].mxu0 %v433
        %v612 = vpop.f32.mrb[0].mxu0
        %v613 = vadd.f32 0.0, %v612
        %v614 = vpop.f32.mrb[0].mxu0
        %v615 = vadd.f32 0.0, %v614
        %v616 = vpop.f32.mrb[0].mxu0
        %v617 = vadd.f32 0.0, %v616
        %v618 = vpop.f32.mrb[0].mxu0
        %v619 = vadd.f32 0.0, %v618
        %620 = vmatprep.mubr.bf16.mxu0 0
        %621 = vmatmul.mubr.bf16.gmra.mrb[0].mxu0 %v436
        %v622 = vpop.f32.mrb[0].mxu0
        %v623 = vadd.f32 0.0, %v622
        %v624 = vpop.f32.mrb[0].mxu0
        %v625 = vadd.f32 0.0, %v624
        %v626 = vpop.f32.mrb[0].mxu0
        %v627 = vadd.f32 0.0, %v626
        %v628 = vpop.f32.mrb[0].mxu0
        %v629 = vadd.f32 0.0, %v628
        %630 = vmatprep.mubr.bf16.mxu0 0
        %631 = vmatmul.mubr.bf16.gmra.mrb[0].mxu0 %v439
        %v632 = vpop.f32.mrb[0].mxu0
        %v633 = vadd.f32 0.0, %v632
        %v634 = vpop.f32.mrb[0].mxu0
        %v635 = vadd.f32 0.0, %v634
        %v636 = vpop.f32.mrb[0].mxu0
        %v637 = vadd.f32 0.0, %v636
        %v638 = vpop.f32.mrb[0].mxu0
        %v639 = vadd.f32 0.0, %v638
        %640 = vdwg.mxu0
        %v641 = vpack.c.bf16 %v487, %v483
        %v642 = vpack.c.bf16 %v489, %v485
        %v643 = vpack.c.bf16 %v497, %v493
        %v644 = vpack.c.bf16 %v499, %v495
        %v645 = vpack.c.bf16 %v507, %v503
        %v646 = vpack.c.bf16 %v509, %v505
        %v647 = vpack.c.bf16 %v517, %v513
        %v648 = vpack.c.bf16 %v519, %v515
        %v649 = vpack.c.bf16 %v527, %v523
        %v650 = vpack.c.bf16 %v529, %v525
        %v651 = vpack.c.bf16 %v537, %v533
        %v652 = vpack.c.bf16 %v539, %v535
        %v653 = vpack.c.bf16 %v547, %v543
        %v654 = vpack.c.bf16 %v549, %v545
        %v655 = vpack.c.bf16 %v557, %v553
        %v656 = vpack.c.bf16 %v559, %v555
        %v657 = vpack.c.bf16 %v567, %v563
        %v658 = vpack.c.bf16 %v569, %v565
        %v659 = vpack.c.bf16 %v577, %v573
        %v660 = vpack.c.bf16 %v579, %v575
        %v661 = vpack.c.bf16 %v587, %v583
        %v662 = vpack.c.bf16 %v589, %v585
        %v663 = vpack.c.bf16 %v597, %v593
        %v664 = vpack.c.bf16 %v599, %v595
        %v665 = vpack.c.bf16 %v607, %v603
        %v666 = vpack.c.bf16 %v609, %v605
        %v667 = vpack.c.bf16 %v617, %v613
        %v668 = vpack.c.bf16 %v619, %v615
        %v669 = vpack.c.bf16 %v627, %v623
        %v670 = vpack.c.bf16 %v629, %v625
        %v671 = vpack.c.bf16 %v637, %v633
        %v672 = vpack.c.bf16 %v639, %v635
        %v705 = vunpack.c.l.b16 %v641
        %v706 = vunpack.c.l.b16 %v642
        %v707 = vunpack.c.h.b16 %v641
        %v708 = vunpack.c.h.b16 %v642
        %v709 = vunpack.c.l.b16 %v643
        %v710 = vunpack.c.l.b16 %v644
        %v711 = vunpack.c.h.b16 %v643
        %v712 = vunpack.c.h.b16 %v644
        %v713 = vunpack.c.l.b16 %v645
        %v714 = vunpack.c.l.b16 %v646
        %v715 = vunpack.c.h.b16 %v645
        %v716 = vunpack.c.h.b16 %v646
        %v717 = vunpack.c.l.b16 %v647
        %v718 = vunpack.c.l.b16 %v648
        %v719 = vunpack.c.h.b16 %v647
        %v720 = vunpack.c.h.b16 %v648
        %v721 = vunpack.c.l.b16 %v649
        %v722 = vunpack.c.l.b16 %v650
        %v723 = vunpack.c.h.b16 %v649
        %v724 = vunpack.c.h.b16 %v650
        %v725 = vunpack.c.l.b16 %v651
        %v726 = vunpack.c.l.b16 %v652
        %v727 = vunpack.c.h.b16 %v651
        %v728 = vunpack.c.h.b16 %v652
        %v729 = vunpack.c.l.b16 %v653
        %v730 = vunpack.c.l.b16 %v654
        %v731 = vunpack.c.h.b16 %v653
        %v732 = vunpack.c.h.b16 %v654
        %v733 = vunpack.c.l.b16 %v655
        %v734 = vunpack.c.l.b16 %v656
        %v735 = vunpack.c.h.b16 %v655
        %v736 = vunpack.c.h.b16 %v656
        %v737 = vunpack.c.l.b16 %v657
        %v738 = vunpack.c.l.b16 %v658
        %v739 = vunpack.c.h.b16 %v657
        %v740 = vunpack.c.h.b16 %v658
        %v741 = vunpack.c.l.b16 %v659
        %v742 = vunpack.c.l.b16 %v660
        %v743 = vunpack.c.h.b16 %v659
        %v744 = vunpack.c.h.b16 %v660
        %v745 = vunpack.c.l.b16 %v661
        %v746 = vunpack.c.l.b16 %v662
        %v747 = vunpack.c.h.b16 %v661
        %v748 = vunpack.c.h.b16 %v662
        %v749 = vunpack.c.l.b16 %v663
        %v750 = vunpack.c.l.b16 %v664
        %v751 = vunpack.c.h.b16 %v663
        %v752 = vunpack.c.h.b16 %v664
        %v753 = vunpack.c.l.b16 %v665
        %v754 = vunpack.c.l.b16 %v666
        %v755 = vunpack.c.h.b16 %v665
        %v756 = vunpack.c.h.b16 %v666
        %v757 = vunpack.c.l.b16 %v667
        %v758 = vunpack.c.l.b16 %v668
        %v759 = vunpack.c.h.b16 %v667
        %v760 = vunpack.c.h.b16 %v668
        %v761 = vunpack.c.l.b16 %v669
        %v762 = vunpack.c.l.b16 %v670
        %v763 = vunpack.c.h.b16 %v669
        %v764 = vunpack.c.h.b16 %v670
        %v765 = vunpack.c.l.b16 %v671
        %v766 = vunpack.c.l.b16 %v672
        %v767 = vunpack.c.h.b16 %v671
        %v768 = vunpack.c.h.b16 %v672
        %v769 = vpack.c.b16 %v706, %v705
        %v770 = vpack.c.b16 %v708, %v707
        %v771 = vpack.c.b16 %v710, %v709
        %v772 = vpack.c.b16 %v712, %v711
        %v773 = vpack.c.b16 %v714, %v713
        %v774 = vpack.c.b16 %v716, %v715
        %v775 = vpack.c.b16 %v718, %v717
        %v776 = vpack.c.b16 %v720, %v719
        %v777 = vpack.c.b16 %v722, %v721
        %v778 = vpack.c.b16 %v724, %v723
        %v779 = vpack.c.b16 %v726, %v725
        %v780 = vpack.c.b16 %v728, %v727
        %v781 = vpack.c.b16 %v730, %v729
        %v782 = vpack.c.b16 %v732, %v731
        %v783 = vpack.c.b16 %v734, %v733
        %v784 = vpack.c.b16 %v736, %v735
        %v785 = vpack.c.b16 %v738, %v737
        %v786 = vpack.c.b16 %v740, %v739
        %v787 = vpack.c.b16 %v742, %v741
        %v788 = vpack.c.b16 %v744, %v743
        %v789 = vpack.c.b16 %v746, %v745
        %v790 = vpack.c.b16 %v748, %v747
        %v791 = vpack.c.b16 %v750, %v749
        %v792 = vpack.c.b16 %v752, %v751
        %v793 = vpack.c.b16 %v754, %v753
        %v794 = vpack.c.b16 %v756, %v755
        %v795 = vpack.c.b16 %v758, %v757
        %v796 = vpack.c.b16 %v760, %v759
        %v797 = vpack.c.b16 %v762, %v761
        %v798 = vpack.c.b16 %v764, %v763
        %v799 = vpack.c.b16 %v766, %v765
        %v800 = vpack.c.b16 %v768, %v767
        %833 = vst [vmem:[%s237] sm:$0xff] %v769
        %834 = vst [vmem:[%s237 + $0x8] sm:$0xff] %v770
        %835 = vst [vmem:[%s237 + $0x10] sm:$0xff] %v771
        %836 = vst [vmem:[%s237 + $0x18] sm:$0xff] %v772
        %837 = vst [vmem:[%s237 + $0x20] sm:$0xff] %v773
        %838 = vst [vmem:[%s237 + $0x28] sm:$0xff] %v774
        %839 = vst [vmem:[%s237 + $0x30] sm:$0xff] %v775
        %840 = vst [vmem:[%s237 + $0x38] sm:$0xff] %v776
        %841 = vst [vmem:[%s237 + $0x40] sm:$0xff] %v777
        %842 = vst [vmem:[%s237 + $0x48] sm:$0xff] %v778
        %843 = vst [vmem:[%s237 + $0x50] sm:$0xff] %v779
        %844 = vst [vmem:[%s237 + $0x58] sm:$0xff] %v780
        %845 = vst [vmem:[%s237 + $0x60] sm:$0xff] %v781
        %846 = vst [vmem:[%s237 + $0x68] sm:$0xff] %v782
        %847 = vst [vmem:[%s237 + $0x70] sm:$0xff] %v783
        %848 = vst [vmem:[%s237 + $0x78] sm:$0xff] %v784
        %849 = vst [vmem:[%s237 + $0x80] sm:$0xff] %v785
        %850 = vst [vmem:[%s237 + $0x88] sm:$0xff] %v786
        %851 = vst [vmem:[%s237 + $0x90] sm:$0xff] %v787
        %852 = vst [vmem:[%s237 + $0x98] sm:$0xff] %v788
        %853 = vst [vmem:[%s237 + $0xa0] sm:$0xff] %v789
        %854 = vst [vmem:[%s237 + $0xa8] sm:$0xff] %v790
        %855 = vst [vmem:[%s237 + $0xb0] sm:$0xff] %v791
        %856 = vst [vmem:[%s237 + $0xb8] sm:$0xff] %v792
        %857 = vst [vmem:[%s237 + $0xc0] sm:$0xff] %v793
        %858 = vst [vmem:[%s237 + $0xc8] sm:$0xff] %v794
        %859 = vst [vmem:[%s237 + $0xd0] sm:$0xff] %v795
        %860 = vst [vmem:[%s237 + $0xd8] sm:$0xff] %v796
        %861 = vst [vmem:[%s237 + $0xe0] sm:$0xff] %v797
        %862 = vst [vmem:[%s237 + $0xe8] sm:$0xff] %v798
        %863 = vst [vmem:[%s237 + $0xf0] sm:$0xff] %v799
        %864 = vst [vmem:[%s237 + $0xf8] sm:$0xff] %v800
        %p865 = scmp.eq.s32.totalorder %s22, 0
        // Predicated region
        $region37: #{tpu_custom_call.1} parent=35 // pred_check
          %p866 = pneg %p865
        $region38: #{tpu_custom_call.1} parent=35 // pred_check_branch
          %868 = sbr.rel (%p866) target = $region40
        $region39: #{tpu_custom_call.1} parent=35 // pred_region
          %v869 = vlaneseq
          %vm870 = vcmp.ge.s32.totalorder %v869, 0
          %vm871 = vcmp.lt.s32.totalorder %v869, 256
          %vm872 = vmand %vm870, %vm871
          %873 = vst.msk [vmem:[#allocation4] sm:$0x3] %vm872, 0.0
          %874 = vst.msk [vmem:[#allocation6] sm:$0x3] %vm872, 0.0
        $region40: #{tpu_custom_call.1} parent=35 // pred_fallthru
          _
        %v875 = vld [vmem:[#allocation4] sm:$0x3]
        %v876 = vadd.f32 %v483, %v487
        %v877 = vadd.f32 %v876, %v493
        %v878 = vadd.f32 %v877, %v497
        %v879 = vadd.f32 %v878, %v503
        %v880 = vadd.f32 %v879, %v507
        %v881 = vadd.f32 %v880, %v513
        %v882 = vadd.f32 %v881, %v517
        %v883 = vadd.f32 %v882, %v523
        %v884 = vadd.f32 %v883, %v527
        %v885 = vadd.f32 %v884, %v533
        %v886 = vadd.f32 %v885, %v537
        %v887 = vadd.f32 %v886, %v543
        %v888 = vadd.f32 %v887, %v547
        %v889 = vadd.f32 %v888, %v553
        %v890 = vadd.f32 %v889, %v557
        %v891 = vadd.f32 %v890, %v563
        %v892 = vadd.f32 %v891, %v567
        %v893 = vadd.f32 %v892, %v573
        %v894 = vadd.f32 %v893, %v577
        %v895 = vadd.f32 %v894, %v583
        %v896 = vadd.f32 %v895, %v587
        %v897 = vadd.f32 %v896, %v593
        %v898 = vadd.f32 %v897, %v597
        %v899 = vadd.f32 %v898, %v603
        %v900 = vadd.f32 %v899, %v607
        %v901 = vadd.f32 %v900, %v613
        %v902 = vadd.f32 %v901, %v617
        %v903 = vadd.f32 %v902, %v623
        %v904 = vadd.f32 %v903, %v627
        %v905 = vadd.f32 %v904, %v633
        %v906 = vadd.f32 %v905, %v637
        %v907 = vrot.slane %v906, 4
        %v908 = vadd.f32 %v906, %v907
        %v909 = vrot.slane %v908, 2
        %v910 = vadd.f32 %v908, %v909
        %v911 = vrot.slane %v910, 1
        %v912 = vadd.f32 %v910, %v911
        %v913 = vadd.f32 %v485, %v489
        %v914 = vadd.f32 %v913, %v495
        %v915 = vadd.f32 %v914, %v499
        %v916 = vadd.f32 %v915, %v505
        %v917 = vadd.f32 %v916, %v509
        %v918 = vadd.f32 %v917, %v515
        %v919 = vadd.f32 %v918, %v519
        %v920 = vadd.f32 %v919, %v525
        %v921 = vadd.f32 %v920, %v529
        %v922 = vadd.f32 %v921, %v535
        %v923 = vadd.f32 %v922, %v539
        %v924 = vadd.f32 %v923, %v545
        %v925 = vadd.f32 %v924, %v549
        %v926 = vadd.f32 %v925, %v555
        %v927 = vadd.f32 %v926, %v559
        %v928 = vadd.f32 %v927, %v565
        %v929 = vadd.f32 %v928, %v569
        %v930 = vadd.f32 %v929, %v575
        %v931 = vadd.f32 %v930, %v579
        %v932 = vadd.f32 %v931, %v585
        %v933 = vadd.f32 %v932, %v589
        %v934 = vadd.f32 %v933, %v595
        %v935 = vadd.f32 %v934, %v599
        %v936 = vadd.f32 %v935, %v605
        %v937 = vadd.f32 %v936, %v609
        %v938 = vadd.f32 %v937, %v615
        %v939 = vadd.f32 %v938, %v619
        %v940 = vadd.f32 %v939, %v625
        %v941 = vadd.f32 %v940, %v629
        %v942 = vadd.f32 %v941, %v635
        %v943 = vadd.f32 %v942, %v639
        %v944 = vrot.slane %v943, 4
        %v945 = vadd.f32 %v943, %v944
        %v946 = vrot.slane %v945, 2
        %v947 = vadd.f32 %v945, %v946
        %v948 = vrot.slane %v947, 1
        %v949 = vadd.f32 %v947, %v948
        %v952 = vcombine.low %v912, %v949
        %v954 = vunpack.c.l.s4 1966171168
        %v955 = vunpack.c.0.s8 %v954
        %v956 = vlaneseq
        %v957 = vshrl.u32 %v956, 7
        %v958 = vsub.s32 %v955, %v957
        %v959 = vrot.slane %v952, %v958
        %v961 = vunpack.c.l.s4 1966171168
        %v962 = vunpack.c.0.s8 %v961
        %v963 = vlaneseq
        %v964 = vshrl.u32 %v963, 7
        %v965 = vsub.s32 %v962, %v964
        %v966 = vrot.slane %v959, %v965
        %v968 = vadd.f32 %v875, %v966
        %v969 = vlaneseq
        %vm970 = vcmp.ge.s32.totalorder %v969, 0
        %vm971 = vcmp.lt.s32.totalorder %v969, 256
        %vm972 = vmand %vm970, %vm971
        %973 = vst.msk [vmem:[#allocation4] sm:$0x3] %vm972, %v968
        %v974 = vld [vmem:[#allocation6] sm:$0x3]
        %v975 = vmul.f32 %v483, %v483
        %v976 = vmul.f32 %v485, %v485
        %v977 = vmul.f32 %v487, %v487
        %v978 = vmul.f32 %v489, %v489
        %v979 = vmul.f32 %v493, %v493
        %v980 = vmul.f32 %v495, %v495
        %v981 = vmul.f32 %v497, %v497
        %v982 = vmul.f32 %v499, %v499
        %v983 = vmul.f32 %v503, %v503
        %v984 = vmul.f32 %v505, %v505
        %v985 = vmul.f32 %v507, %v507
        %v986 = vmul.f32 %v509, %v509
        %v987 = vmul.f32 %v513, %v513
        %v988 = vmul.f32 %v515, %v515
        %v989 = vmul.f32 %v517, %v517
        %v990 = vmul.f32 %v519, %v519
        %v991 = vmul.f32 %v523, %v523
        %v992 = vmul.f32 %v525, %v525
        %v993 = vmul.f32 %v527, %v527
        %v994 = vmul.f32 %v529, %v529
        %v995 = vmul.f32 %v533, %v533
        %v996 = vmul.f32 %v535, %v535
        %v997 = vmul.f32 %v537, %v537
        %v998 = vmul.f32 %v539, %v539
        %v999 = vmul.f32 %v543, %v543
        %v1000 = vmul.f32 %v545, %v545
        %v1001 = vmul.f32 %v547, %v547
        %v1002 = vmul.f32 %v549, %v549
        %v1003 = vmul.f32 %v553, %v553
        %v1004 = vmul.f32 %v555, %v555
        %v1005 = vmul.f32 %v557, %v557
        %v1006 = vmul.f32 %v559, %v559
        %v1007 = vmul.f32 %v563, %v563
        %v1008 = vmul.f32 %v565, %v565
        %v1009 = vmul.f32 %v567, %v567
        %v1010 = vmul.f32 %v569, %v569
        %v1011 = vmul.f32 %v573, %v573
        %v1012 = vmul.f32 %v575, %v575
        %v1013 = vmul.f32 %v577, %v577
        %v1014 = vmul.f32 %v579, %v579
        %v1015 = vmul.f32 %v583, %v583
        %v1016 = vmul.f32 %v585, %v585
        %v1017 = vmul.f32 %v587, %v587
        %v1018 = vmul.f32 %v589, %v589
        %v1019 = vmul.f32 %v593, %v593
        %v1020 = vmul.f32 %v595, %v595
        %v1021 = vmul.f32 %v597, %v597
        %v1022 = vmul.f32 %v599, %v599
        %v1023 = vmul.f32 %v603, %v603
        %v1024 = vmul.f32 %v605, %v605
        %v1025 = vmul.f32 %v607, %v607
        %v1026 = vmul.f32 %v609, %v609
        %v1027 = vmul.f32 %v613, %v613
        %v1028 = vmul.f32 %v615, %v615
        %v1029 = vmul.f32 %v617, %v617
        %v1030 = vmul.f32 %v619, %v619
        %v1031 = vmul.f32 %v623, %v623
        %v1032 = vmul.f32 %v625, %v625
        %v1033 = vmul.f32 %v627, %v627
        %v1034 = vmul.f32 %v629, %v629
        %v1035 = vmul.f32 %v633, %v633
        %v1036 = vmul.f32 %v635, %v635
        %v1037 = vmul.f32 %v637, %v637
        %v1038 = vmul.f32 %v639, %v639
        %v1039 = vadd.f32 %v975, %v977
        %v1040 = vadd.f32 %v1039, %v979
        %v1041 = vadd.f32 %v1040, %v981
        %v1042 = vadd.f32 %v1041, %v983
        %v1043 = vadd.f32 %v1042, %v985
        %v1044 = vadd.f32 %v1043, %v987
        %v1045 = vadd.f32 %v1044, %v989
        %v1046 = vadd.f32 %v1045, %v991
        %v1047 = vadd.f32 %v1046, %v993
        %v1048 = vadd.f32 %v1047, %v995
        %v1049 = vadd.f32 %v1048, %v997
        %v1050 = vadd.f32 %v1049, %v999
        %v1051 = vadd.f32 %v1050, %v1001
        %v1052 = vadd.f32 %v1051, %v1003
        %v1053 = vadd.f32 %v1052, %v1005
        %v1054 = vadd.f32 %v1053, %v1007
        %v1055 = vadd.f32 %v1054, %v1009
        %v1056 = vadd.f32 %v1055, %v1011
        %v1057 = vadd.f32 %v1056, %v1013
        %v1058 = vadd.f32 %v1057, %v1015
        %v1059 = vadd.f32 %v1058, %v1017
        %v1060 = vadd.f32 %v1059, %v1019
        %v1061 = vadd.f32 %v1060, %v1021
        %v1062 = vadd.f32 %v1061, %v1023
        %v1063 = vadd.f32 %v1062, %v1025
        %v1064 = vadd.f32 %v1063, %v1027
        %v1065 = vadd.f32 %v1064, %v1029
        %v1066 = vadd.f32 %v1065, %v1031
        %v1067 = vadd.f32 %v1066, %v1033
        %v1068 = vadd.f32 %v1067, %v1035
        %v1069 = vadd.f32 %v1068, %v1037
        %v1070 = vrot.slane %v1069, 4
        %v1071 = vadd.f32 %v1069, %v1070
        %v1072 = vrot.slane %v1071, 2
        %v1073 = vadd.f32 %v1071, %v1072
        %v1074 = vrot.slane %v1073, 1
        %v1075 = vadd.f32 %v1073, %v1074
        %v1076 = vadd.f32 %v976, %v978
        %v1077 = vadd.f32 %v1076, %v980
        %v1078 = vadd.f32 %v1077, %v982
        %v1079 = vadd.f32 %v1078, %v984
        %v1080 = vadd.f32 %v1079, %v986
        %v1081 = vadd.f32 %v1080, %v988
        %v1082 = vadd.f32 %v1081, %v990
        %v1083 = vadd.f32 %v1082, %v992
        %v1084 = vadd.f32 %v1083, %v994
        %v1085 = vadd.f32 %v1084, %v996
        %v1086 = vadd.f32 %v1085, %v998
        %v1087 = vadd.f32 %v1086, %v1000
        %v1088 = vadd.f32 %v1087, %v1002
        %v1089 = vadd.f32 %v1088, %v1004
        %v1090 = vadd.f32 %v1089, %v1006
        %v1091 = vadd.f32 %v1090, %v1008
        %v1092 = vadd.f32 %v1091, %v1010
        %v1093 = vadd.f32 %v1092, %v1012
        %v1094 = vadd.f32 %v1093, %v1014
        %v1095 = vadd.f32 %v1094, %v1016
        %v1096 = vadd.f32 %v1095, %v1018
        %v1097 = vadd.f32 %v1096, %v1020
        %v1098 = vadd.f32 %v1097, %v1022
        %v1099 = vadd.f32 %v1098, %v1024
        %v1100 = vadd.f32 %v1099, %v1026
        %v1101 = vadd.f32 %v1100, %v1028
        %v1102 = vadd.f32 %v1101, %v1030
        %v1103 = vadd.f32 %v1102, %v1032
        %v1104 = vadd.f32 %v1103, %v1034
        %v1105 = vadd.f32 %v1104, %v1036
        %v1106 = vadd.f32 %v1105, %v1038
        %v1107 = vrot.slane %v1106, 4
        %v1108 = vadd.f32 %v1106, %v1107
        %v1109 = vrot.slane %v1108, 2
        %v1110 = vadd.f32 %v1108, %v1109
        %v1111 = vrot.slane %v1110, 1
        %v1112 = vadd.f32 %v1110, %v1111
        %v1115 = vcombine.low %v1075, %v1112
        %v1117 = vunpack.c.l.s4 1966171168
        %v1118 = vunpack.c.0.s8 %v1117
        %v1119 = vlaneseq
        %v1120 = vshrl.u32 %v1119, 7
        %v1121 = vsub.s32 %v1118, %v1120
        %v1122 = vrot.slane %v1115, %v1121
        %v1124 = vunpack.c.l.s4 1966171168
        %v1125 = vunpack.c.0.s8 %v1124
        %v1126 = vlaneseq
        %v1127 = vshrl.u32 %v1126, 7
        %v1128 = vsub.s32 %v1125, %v1127
        %v1129 = vrot.slane %v1122, %v1128
        %v1131 = vadd.f32 %v974, %v1129
        %1132 = vst.msk [vmem:[#allocation6] sm:$0x3] %vm972, %v1131
        %p1133 = scmp.eq.s32.totalorder %s22, 1
        // Predicated region
        $region41: #{tpu_custom_call.1} parent=35 // pred_check
          %p1134 = pneg %p1133
        $region42: #{tpu_custom_call.1} parent=35 // pred_check_branch
          %1136 = sbr.rel (%p1134) target = $region44
        $region43: #{tpu_custom_call.1} parent=35 // pred_region
          %v1137 = vld [vmem:[#allocation4] sm:$0x3]
          %v1138 = vmul.f32 %v1137, 0.001953125
          %v1139 = vld [vmem:[#allocation6] sm:$0x3]
          %v1140 = vmul.f32 %v1139, 0.001953125
          %v1141 = vmul.f32 %v1138, %v1138
          %v1142 = vsub.f32 %v1140, %v1141
          %v1143 = vld [vmem:[%s2] sm:$0x3]
          %v1144 = vadd.f32 %v1142, 1e-05
          %v1145 = vrsqrt.pop %v1144
          %v1146 = vmul.f32 %v1143, %v1145
          %1147 = vst.msk [vmem:[#allocation4] sm:$0x3] %vm972, %v1146
          %v1148 = vld [vmem:[%s3] sm:$0x3]
          %v1149 = vmul.f32 %v1138, %v1146
          %v1150 = vsub.f32 %v1148, %v1149
          %1151 = vst.msk [vmem:[#allocation6] sm:$0x3] %vm972, %v1150
        $region44: #{tpu_custom_call.1} parent=35 // pred_fallthru
          _
        %s1152 = sand.u32 %s119, 1
        %s1153 = scalar_lea.sflag [#allocation3], %s1152
        %s1154 = sand.u32 %s119, 1
        %s1155 = smul.addr %s1154, 256
        %s1156 = scalar_lea.vmem [#allocation2], %s1155
        // Predicated region
        $region45: #{tpu_custom_call.1} parent=35 // pred_check
          %p1157 = pneg %p129
        $region46: #{tpu_custom_call.1} parent=35 // pred_check_branch
          %1159 = sbr.rel (%p1157) target = $region48
        $region47: #{tpu_custom_call.1} parent=35 // pred_region
          %s1160 = smul.u32 32, %s22
          %s1162 = ssub.s32 4096, 4096
          %1163 = vsyncadd %s1153, %s1162
          %s1164 = smul.addr %s1160, 2
          %s1165 = smul.addr %s1164, 64
          %s1166 = scalar_lea.hbm %s4, %s1165
          %s1167 = sshll.u32 %s1156, 4
          %s1168 = int_to_ptr.vmem [resolvable:$true] %s1167
          %1173 = dma.vmem_to_hbm [thread:$0]  %s1168, 4096, %s1166, %s1153, 128, 128, 8
        $region48: #{tpu_custom_call.1} parent=35 // pred_fallthru
          _
        // Predicated region
        $region49: #{tpu_custom_call.1} parent=35 // pred_check
          %p1174 = pneg %p150
        $region50: #{tpu_custom_call.1} parent=35 // pred_check_branch
          %1176 = sbr.rel (%p1174) target = $region52
        $region51: #{tpu_custom_call.1} parent=35 // pred_region
          %s1178 = ssub.s32 32, 32
          %1179 = vsyncadd [#allocation5], %s1178
          %s1181 = sshll.u32 [#allocation4], 4
          %s1182 = int_to_ptr.vmem [resolvable:$true] %s1181
          %1184 = dma.vmem_to_hbm [thread:$0]  %s1182, 32, %s5, [#allocation5]
        $region52: #{tpu_custom_call.1} parent=35 // pred_fallthru
          _
        // Predicated region
        $region53: #{tpu_custom_call.1} parent=35 // pred_check
          %p1185 = pneg %p171
        $region54: #{tpu_custom_call.1} parent=35 // pred_check_branch
          %1187 = sbr.rel (%p1185) target = $region56
        $region55: #{tpu_custom_call.1} parent=35 // pred_region
          %s1189 = ssub.s32 32, 32
          %1190 = vsyncadd [#allocation5], %s1189
          %s1192 = sshll.u32 [#allocation6], 4
          %s1193 = int_to_ptr.vmem [resolvable:$true] %s1192
          %1195 = dma.vmem_to_hbm [thread:$0]  %s1193, 32, %s6, [#allocation5]
        $region56: #{tpu_custom_call.1} parent=35 // pred_fallthru
          _
        // Predicated region
        $region57: #{tpu_custom_call.1} parent=35 // pred_check
          %p1196 = pneg %p150
        $region58: #{tpu_custom_call.1} parent=35 // pred_check_branch
          %1198 = sbr.rel (%p1196) target = $region60
        $region59: #{tpu_custom_call.1} parent=35 // pred_region
          %1199 = dma.done [#allocation5], 32
        $region60: #{tpu_custom_call.1} parent=35 // pred_fallthru
          _
        // Predicated region
        $region61: #{tpu_custom_call.1} parent=35 // pred_check
          %p1200 = pneg %p171
        $region62: #{tpu_custom_call.1} parent=35 // pred_check_branch
          %1202 = sbr.rel (%p1200) target = $region64
        $region63: #{tpu_custom_call.1} parent=35 // pred_region
          %1203 = dma.done [#allocation5], 32
        $region64: #{tpu_custom_call.1} parent=35 // pred_fallthru
          _
      $region36: #{tpu_custom_call.1} parent=5 // pred_fallthru
        _
      %p1204 = scmp.le.s32.totalorder 2, %s17
      // Predicated region
      $region65: #{tpu_custom_call.1} parent=5 // pred_check
        %p1205 = pneg %p1204
      $region66: #{tpu_custom_call.1} parent=5 // pred_check_branch
        %1207 = sbr.rel (%p1205) target = $region68
      $region67: #{tpu_custom_call.1} parent=5 // pred_region
        %s1208 = ssub.s32 %s17, 2
        // Predicated region
        $region69: #{tpu_custom_call.1} parent=67 // pred_check
          %p1209 = pneg %p135
        $region70: #{tpu_custom_call.1} parent=67 // pred_check_branch
          %1211 = sbr.rel (%p1209) target = $region72
        $region71: #{tpu_custom_call.1} parent=67 // pred_region
          %s1212 = sand.u32 %s120, 1
          %s1213 = scalar_lea.sflag [#allocation3], %s1212
          %s1214 = sand.u32 %s120, 1
          %s1215 = smul.addr %s1214, 256
          %s1216 = scalar_lea.vmem [#allocation2], %s1215
          %1217 = dma.done %s1213, 4096
        $region72: #{tpu_custom_call.1} parent=67 // pred_fallthru
          _
      $region68: #{tpu_custom_call.1} parent=5 // pred_fallthru
        _
    $region6: #{tpu_custom_call.1} parent=1 // loop_footer
      %s21 = sadd.s32 1, %s17
    $region7: #{tpu_custom_call.1} parent=1 // loop_footer_branch
      %16 = sbr.rel target = $region3
    $region8: #{tpu_custom_call.1} parent=1 // loop_exit
      _
    %1218 = vsyncpa [#allocation3], 1
    %s1219 = scalar_lea.sflag [#allocation3], 1
    %1220 = vsyncpa %s1219, 1
    %1221 = vsyncpa [#allocation5], 1

</llo_original>
